<compile_context>
chip_gen: v5e
topology: v5e:2x2
jax: 0.10.0
libtpu: 0.0.40
codegen_flags: <defaults>
</compile_context>

<pallas_src>
import jax
import jax.numpy as jnp
from jax.experimental import pallas as pl
from jax.experimental.pallas import tpu as pltpu


def _elu(z):
    # PyTorch ELU (alpha=1.0): z if z > 0 else exp(z) - 1.  Kept in f32 on every chip
    # (v5e's VPU/EUP have no bf16 path; exp lands on the otherwise-idle EUP slot).
    return jnp.where(z > 0, z, jnp.exp(z) - 1.0)


def _mm(a, w_ref):
    # MXU matmul: operands cast to the (possibly bf16) weight dtype, f32 accumulation.
    return jnp.dot(a.astype(w_ref.dtype), w_ref[...],
                   preferred_element_type=jnp.float32)


def critic_kernel(x_ref, w1_ref, b1_ref, w2_ref, b2_ref, w3_ref, b3_ref,
                  wv_ref, bv_ref, out_ref):
    # One batch tile per grid step; weights/biases use constant index_maps so Pallas
    # keeps them VMEM-resident across grid steps.
    # NOTE: rows of a padded partial last tile hold undefined VMEM contents and do run
    # through exp(); any inf/NaN stays confined to those rows and is masked on the
    # (block_m, 1) output writeback — benign (don't be alarmed by NaN scans there).
    h = _elu(_mm(x_ref[...], w1_ref) + b1_ref[...])
    h = _elu(_mm(h, w2_ref) + b2_ref[...])
    h = _elu(_mm(h, w3_ref) + b3_ref[...])
    # Final Linear(u3, 1): VPU multiply + lane (XLU) reduction in f32 — no point
    # pushing an N=1 matmul through the MXU.
    v = jnp.sum(h * wv_ref[...], axis=-1, keepdims=True) + bv_ref[...]
    out_ref[...] = v.astype(out_ref.dtype)
    # TODO(synk): a lane-dense (1, block_m) row output (plus wrapper re-slice) would
    # replace the masked (block_m, 1) column store; skipped because the value output
    # is only 4 bytes/row (<<0.1% of traffic here) and the column->row relayout adds
    # lowering risk for no measurable gain.


def _round_up(v, m):
    return ((v + m - 1) // m) * m


_MAX_BLOCK_M = 2048     # ~9-12 MiB of activations/buffers per step: fits v7x's 64 MiB VMEM.
_SINGLE_STEP_MAX = 256  # below this, one grid step beats splitting (latency/DMA-bound).


def critic_forward(x, params, *, block_m=None, weight_dtype=jnp.bfloat16):
    """x: (B, input_dim) float32.  params: dict of weights/biases.  Returns (B, 1) f32."""
    B, input_dim = x.shape
    w1, b1 = params["w1"], params["b1"]
    w2, b2 = params["w2"], params["b2"]
    w3, b3 = params["w3"], params["b3"]
    wv, bv = params["wv"], params["bv"]
    u1, u2, u3 = w1.shape[1], w2.shape[1], w3.shape[1]
    # Value head as a broadcast row for the in-kernel reduction; stays f32 everywhere.
    wv_row = wv.reshape(1, u3)

    if weight_dtype is not None:
        # bf16 matmul operands on all generations (MXU is bf16-native; f32 is multi-pass)
        # and half the weight-DMA bytes.  Accumulation / elementwise stay f32 in-kernel.
        w1, w2, w3 = (w.astype(weight_dtype) for w in (w1, w2, w3))

    if block_m is None:
        if B <= _SINGLE_STEP_MAX:
            block_m = B              # whole batch in one step: zero pipeline overhead
        else:
            # >=2 balanced steps (keeps both v7x TensorCores busy), <=2048 rows each,
            # multiple of 8 (sublane rule); balancing avoids a 2048 + tiny-remainder
            # split where one step / one core does a full-size matmul on garbage rows.
            num_blocks = max(2, pl.cdiv(B, _MAX_BLOCK_M))
            block_m = _round_up(pl.cdiv(B, num_blocks), 8)
    else:
        # Guard caller-provided tile: multiple of 8 unless it covers the whole batch.
        block_m = B if block_m >= B else _round_up(block_m, 8)

    num_blocks = pl.cdiv(B, block_m)

    def const_spec(shape):
        # Constant index_map -> tile fetched once and kept resident across grid steps.
        # TODO(synk): pipeline_mode=pl.Buffered(1) would also drop the unused second
        # buffer (~0.35 MiB bf16); left at the default to stay conservative on lowering.
        return pl.BlockSpec(shape, lambda i: (0,) * len(shape))

    # Advisory cost hint so XLA can overlap neighbouring ops around the custom call
    # (this is where the remaining time goes in the latency-bound small-batch case).
    weight_bytes = sum(int(a.size) * a.dtype.itemsize
                       for a in (w1, w2, w3, b1, b2, b3, wv_row, bv))
    cost = pl.CostEstimate(
        flops=2 * B * (input_dim * u1 + u1 * u2 + u2 * u3 + u3),
        transcendentals=B * (u1 + u2 + u3),
        bytes_accessed=int(x.size) * x.dtype.itemsize + B * 4 + weight_bytes,
    )

    return pl.pallas_call(
        critic_kernel,
        out_shape=jax.ShapeDtypeStruct((B, 1), jnp.float32),
        grid_spec=pltpu.PrefetchScalarGridSpec(
            num_scalar_prefetch=0,
            grid=(num_blocks,),
            in_specs=[
                pl.BlockSpec((block_m, input_dim), lambda i: (i, 0)),   # x tile
                const_spec((input_dim, u1)), const_spec((1, u1)),
                const_spec((u1, u2)),        const_spec((1, u2)),
                const_spec((u2, u3)),        const_spec((1, u3)),
                const_spec((1, u3)),                                    # wv as a row (f32)
                const_spec((1, 1)),                                     # bv
            ],
            out_specs=pl.BlockSpec((block_m, 1), lambda i: (i, 0)),
        ),
        compiler_params=pltpu.CompilerParams(
            dimension_semantics=("parallel",),
            # Large tiles can exceed v5e's 16 MiB scoped-VMEM default; 48 MiB still
            # leaves headroom under v7x's 64 MiB physical VMEM.
            vmem_limit_bytes=(48 * 1024 * 1024 if block_m > 512 else None),
        ),
        cost_estimate=cost,
    )(x, w1, b1, w2, b2, w3, b3, wv_row, bv)


def init_params(key, input_dim, mlp_units=(512, 256, 128)):
    """Deterministic synthetic init (roughly PyTorch-Linear-scaled)."""
    dims = [input_dim] + list(mlp_units)
    params = {}
    keys = jax.random.split(key, 2 * (len(mlp_units) + 1))
    for li, (din, dout) in enumerate(zip(dims[:-1], dims[1:])):
        bound = 1.0 / jnp.sqrt(din)
        params[f"w{li + 1}"] = jax.random.uniform(
            keys[2 * li], (din, dout), jnp.float32, -bound, bound)
        params[f"b{li + 1}"] = jax.random.uniform(
            keys[2 * li + 1], (1, dout), jnp.float32, -bound, bound)
    din = dims[-1]
    bound = 1.0 / jnp.sqrt(din)
    params["wv"] = jax.random.uniform(keys[-2], (din, 1), jnp.float32, -bound, bound)
    params["bv"] = jax.random.uniform(keys[-1], (1, 1), jnp.float32, -bound, bound)
    return params


def critic_reference(x, params):
    """Pure-JAX reference of the PyTorch forward (for verification)."""
    h = x
    for li in range(1, 4):
        h = jax.nn.elu(h @ params[f"w{li}"] + params[f"b{li}"])
    return h @ params["wv"] + params["bv"]


if __name__ == "__main__":
    # TODO(synk): RunningMeanStd / norm_obs is not used in forward(); not implemented.
    key = jax.random.PRNGKey(0)
    k_param, k_x, k_x2 = jax.random.split(key, 3)

    batch, input_dim = 40, 32
    params = init_params(k_param, input_dim)
    x = jax.random.normal(k_x, (batch, input_dim), jnp.float32)
    ref = critic_reference(x, params)

    # 1) f32 weights, whole (small) batch in a single grid step: bit-tight check.
    v_f32 = jax.block_until_ready(critic_forward(x, params, weight_dtype=jnp.float32))
    assert v_f32.shape == (batch, 1), v_f32.shape
    assert jnp.allclose(v_f32, ref, atol=1e-4, rtol=1e-4), (
        float(jnp.max(jnp.abs(v_f32 - ref))))

    # 2) Default path (bf16 matmul weights): bf16 operands -> looser tolerance expected.
    v_bf16 = jax.block_until_ready(critic_forward(x, params))
    assert v_bf16.shape == (batch, 1), v_bf16.shape
    assert jnp.allclose(v_bf16, ref, atol=5e-2, rtol=5e-2), (
        float(jnp.max(jnp.abs(v_bf16 - ref))))

    # 3) Explicit small tile: exercises the grid loop + masked partial last tile.
    v_tiled = jax.block_until_ready(
        critic_forward(x, params, block_m=16, weight_dtype=jnp.float32))
    assert v_tiled.shape == (batch, 1), v_tiled.shape
    assert jnp.allclose(v_tiled, ref, atol=1e-4, rtol=1e-4), (
        float(jnp.max(jnp.abs(v_tiled - ref))))

    # 4) B just above the single-step threshold: exercises the balanced >=2-step path
    #    (two ~152-row tiles rather than 256 + remainder).
    batch2 = 300
    x2 = jax.random.normal(k_x2, (batch2, input_dim), jnp.float32)
    ref2 = critic_reference(x2, params)
    v2 = jax.block_until_ready(critic_forward(x2, params, weight_dtype=jnp.float32))
    assert v2.shape == (batch2, 1), v2.shape
    assert jnp.allclose(v2, ref2, atol=1e-4, rtol=1e-4), (
        float(jnp.max(jnp.abs(v2 - ref2))))

    print("KERNEL_OK")
</pallas_src>

<mosaic_0001>
module attributes {stable_mosaic.version = 11 : i64} {
  func.func @critic_kernel(%arg0: i32, %arg1: memref<40x32xf32, #tpu.memory_space<vmem>>, %arg2: memref<32x512xf32, #tpu.memory_space<vmem>>, %arg3: memref<1x512xf32, #tpu.memory_space<vmem>>, %arg4: memref<512x256xf32, #tpu.memory_space<vmem>>, %arg5: memref<1x256xf32, #tpu.memory_space<vmem>>, %arg6: memref<256x128xf32, #tpu.memory_space<vmem>>, %arg7: memref<1x128xf32, #tpu.memory_space<vmem>>, %arg8: memref<1x128xf32, #tpu.memory_space<vmem>>, %arg9: memref<1x1xf32, #tpu.memory_space<vmem>>, %arg10: memref<40x1xf32, #tpu.memory_space<vmem>>) attributes {dimension_semantics = [#tpu.dimension_semantics<parallel>], iteration_bounds = array<i64: 1>, scalar_prefetch = 0 : i64, scratch_operands = 0 : i64, tpu.core_type = #tpu.core_type<tc>, window_params = [{transform_indices = @transform_0, window_bounds = array<i64: 40, 32>}, {pipeline_mode = #tpu.pipeline_mode<synchronous>, transform_indices = @transform_1, window_bounds = array<i64: 32, 512>}, {pipeline_mode = #tpu.pipeline_mode<synchronous>, transform_indices = @transform_2, window_bounds = array<i64: 1, 512>}, {pipeline_mode = #tpu.pipeline_mode<synchronous>, transform_indices = @transform_3, window_bounds = array<i64: 512, 256>}, {pipeline_mode = #tpu.pipeline_mode<synchronous>, transform_indices = @transform_4, window_bounds = array<i64: 1, 256>}, {pipeline_mode = #tpu.pipeline_mode<synchronous>, transform_indices = @transform_5, window_bounds = array<i64: 256, 128>}, {pipeline_mode = #tpu.pipeline_mode<synchronous>, transform_indices = @transform_6, window_bounds = array<i64: 1, 128>}, {pipeline_mode = #tpu.pipeline_mode<synchronous>, transform_indices = @transform_7, window_bounds = array<i64: 1, 128>}, {pipeline_mode = #tpu.pipeline_mode<synchronous>, transform_indices = @transform_8, window_bounds = array<i64: 1, 1>}, {transform_indices = @transform_9, window_bounds = array<i64: 40, 1>}]} {
    %c0 = arith.constant 0 : index
    %c0_0 = arith.constant 0 : index
    %0 = vector.load %arg1[%c0, %c0_0] : memref<40x32xf32, #tpu.memory_space<vmem>>, vector<40x32xf32>
    %c0_1 = arith.constant 0 : index
    %c0_2 = arith.constant 0 : index
    %1 = vector.load %arg2[%c0_1, %c0_2] : memref<32x512xf32, #tpu.memory_space<vmem>>, vector<32x512xf32>
    %cst = arith.constant dense<0.000000e+00> : vector<40x512xf32>
    %2 = tpu.matmul %0, %1, %cst {dimension_numbers = #tpu.dot_dimension_numbers<[1], [0], [0], [1], [0, 0, 1, 1], [], []>} : vector<40x32xf32>, vector<32x512xf32>, vector<40x512xf32> -> vector<40x512xf32>
    %c0_3 = arith.constant 0 : index
    %c0_4 = arith.constant 0 : index
    %3 = vector.load %arg3[%c0_3, %c0_4] : memref<1x512xf32, #tpu.memory_space<vmem>>, vector<1x512xf32>
    %4 = vector.broadcast %3 : vector<1x512xf32> to vector<40x512xf32>
    %5 = arith.addf %2, %4 : vector<40x512xf32>
    %cst_5 = arith.constant 0.000000e+00 : f32
    %6 = vector.broadcast %cst_5 : f32 to vector<40x512xf32>
    %7 = arith.cmpf ogt, %5, %6 : vector<40x512xf32>
    %8 = math.exp %5 : vector<40x512xf32>
    %cst_6 = arith.constant 1.000000e+00 : f32
    %9 = vector.broadcast %cst_6 : f32 to vector<40x512xf32>
    %10 = arith.subf %8, %9 : vector<40x512xf32>
    %11 = arith.select %7, %5, %10 : vector<40x512xi1>, vector<40x512xf32>
    %c0_7 = arith.constant 0 : index
    %c0_8 = arith.constant 0 : index
    %12 = vector.load %arg4[%c0_7, %c0_8] : memref<512x256xf32, #tpu.memory_space<vmem>>, vector<512x256xf32>
    %cst_9 = arith.constant dense<0.000000e+00> : vector<40x256xf32>
    %13 = tpu.matmul %11, %12, %cst_9 {dimension_numbers = #tpu.dot_dimension_numbers<[1], [0], [0], [1], [0, 0, 1, 1], [], []>} : vector<40x512xf32>, vector<512x256xf32>, vector<40x256xf32> -> vector<40x256xf32>
    %c0_10 = arith.constant 0 : index
    %c0_11 = arith.constant 0 : index
    %14 = vector.load %arg5[%c0_10, %c0_11] : memref<1x256xf32, #tpu.memory_space<vmem>>, vector<1x256xf32>
    %15 = vector.broadcast %14 : vector<1x256xf32> to vector<40x256xf32>
    %16 = arith.addf %13, %15 : vector<40x256xf32>
    %cst_12 = arith.constant 0.000000e+00 : f32
    %17 = vector.broadcast %cst_12 : f32 to vector<40x256xf32>
    %18 = arith.cmpf ogt, %16, %17 : vector<40x256xf32>
    %19 = math.exp %16 : vector<40x256xf32>
    %cst_13 = arith.constant 1.000000e+00 : f32
    %20 = vector.broadcast %cst_13 : f32 to vector<40x256xf32>
    %21 = arith.subf %19, %20 : vector<40x256xf32>
    %22 = arith.select %18, %16, %21 : vector<40x256xi1>, vector<40x256xf32>
    %c0_14 = arith.constant 0 : index
    %c0_15 = arith.constant 0 : index
    %23 = vector.load %arg6[%c0_14, %c0_15] : memref<256x128xf32, #tpu.memory_space<vmem>>, vector<256x128xf32>
    %cst_16 = arith.constant dense<0.000000e+00> : vector<40x128xf32>
    %24 = tpu.matmul %22, %23, %cst_16 {dimension_numbers = #tpu.dot_dimension_numbers<[1], [0], [0], [1], [0, 0, 1, 1], [], []>} : vector<40x256xf32>, vector<256x128xf32>, vector<40x128xf32> -> vector<40x128xf32>
    %c0_17 = arith.constant 0 : index
    %c0_18 = arith.constant 0 : index
    %25 = vector.load %arg7[%c0_17, %c0_18] : memref<1x128xf32, #tpu.memory_space<vmem>>, vector<1x128xf32>
    %26 = vector.broadcast %25 : vector<1x128xf32> to vector<40x128xf32>
    %27 = arith.addf %24, %26 : vector<40x128xf32>
    %cst_19 = arith.constant 0.000000e+00 : f32
    %28 = vector.broadcast %cst_19 : f32 to vector<40x128xf32>
    %29 = arith.cmpf ogt, %27, %28 : vector<40x128xf32>
    %30 = math.exp %27 : vector<40x128xf32>
    %cst_20 = arith.constant 1.000000e+00 : f32
    %31 = vector.broadcast %cst_20 : f32 to vector<40x128xf32>
    %32 = arith.subf %30, %31 : vector<40x128xf32>
    %33 = arith.select %29, %27, %32 : vector<40x128xi1>, vector<40x128xf32>
    %c0_21 = arith.constant 0 : index
    %c0_22 = arith.constant 0 : index
    %34 = vector.load %arg8[%c0_21, %c0_22] : memref<1x128xf32, #tpu.memory_space<vmem>>, vector<1x128xf32>
    %35 = vector.broadcast %34 : vector<1x128xf32> to vector<40x128xf32>
    %36 = arith.mulf %33, %35 : vector<40x128xf32>
    %cst_23 = arith.constant dense<0.000000e+00> : vector<40xf32>
    %37 = vector.multi_reduction <add>, %36, %cst_23 [1] : vector<40x128xf32> to vector<40xf32>
    %38 = vector.shape_cast %37 : vector<40xf32> to vector<40x1xf32>
    %c0_24 = arith.constant 0 : index
    %c0_25 = arith.constant 0 : index
    %39 = vector.load %arg9[%c0_24, %c0_25] : memref<1x1xf32, #tpu.memory_space<vmem>>, vector<1x1xf32>
    %40 = vector.broadcast %39 : vector<1x1xf32> to vector<40x1xf32>
    %41 = arith.addf %38, %40 : vector<40x1xf32>
    %c0_26 = arith.constant 0 : index
    %c0_27 = arith.constant 0 : index
    %42 = vector.load %arg10[%c0_26, %c0_27] : memref<40x1xf32, #tpu.memory_space<vmem>>, vector<40x1xf32>
    tpu.vector_store %arg10[%c0_26, %c0_27], %41 {strides = array<i32>} : memref<40x1xf32, #tpu.memory_space<vmem>>, vector<40x1xf32>,
    return
  }
  func.func @transform_0(%arg0: i32) -> (i32, i32) {
    %c0_i32 = arith.constant 0 : i32
    %c0_i32_0 = arith.constant 0 : i32
    return %arg0, %c0_i32 : i32, i32
  }
  func.func @transform_1(%arg0: i32) -> (i32, i32) {
    %c0_i32 = arith.constant 0 : i32
    %c0_i32_0 = arith.constant 0 : i32
    %c0_i32_1 = arith.constant 0 : i32
    return %c0_i32, %c0_i32_0 : i32, i32
  }
  func.func @transform_2(%arg0: i32) -> (i32, i32) {
    %c0_i32 = arith.constant 0 : i32
    %c0_i32_0 = arith.constant 0 : i32
    %c0_i32_1 = arith.constant 0 : i32
    return %c0_i32, %c0_i32_0 : i32, i32
  }
  func.func @transform_3(%arg0: i32) -> (i32, i32) {
    %c0_i32 = arith.constant 0 : i32
    %c0_i32_0 = arith.constant 0 : i32
    %c0_i32_1 = arith.constant 0 : i32
    return %c0_i32, %c0_i32_0 : i32, i32
  }
  func.func @transform_4(%arg0: i32) -> (i32, i32) {
    %c0_i32 = arith.constant 0 : i32
    %c0_i32_0 = arith.constant 0 : i32
    %c0_i32_1 = arith.constant 0 : i32
    return %c0_i32, %c0_i32_0 : i32, i32
  }
  func.func @transform_5(%arg0: i32) -> (i32, i32) {
    %c0_i32 = arith.constant 0 : i32
    %c0_i32_0 = arith.constant 0 : i32
    %c0_i32_1 = arith.constant 0 : i32
    return %c0_i32, %c0_i32_0 : i32, i32
  }
  func.func @transform_6(%arg0: i32) -> (i32, i32) {
    %c0_i32 = arith.constant 0 : i32
    %c0_i32_0 = arith.constant 0 : i32
    %c0_i32_1 = arith.constant 0 : i32
    return %c0_i32, %c0_i32_0 : i32, i32
  }
  func.func @transform_7(%arg0: i32) -> (i32, i32) {
    %c0_i32 = arith.constant 0 : i32
    %c0_i32_0 = arith.constant 0 : i32
    %c0_i32_1 = arith.constant 0 : i32
    return %c0_i32, %c0_i32_0 : i32, i32
  }
  func.func @transform_8(%arg0: i32) -> (i32, i32) {
    %c0_i32 = arith.constant 0 : i32
    %c0_i32_0 = arith.constant 0 : i32
    %c0_i32_1 = arith.constant 0 : i32
    return %c0_i32, %c0_i32_0 : i32, i32
  }
  func.func @transform_9(%arg0: i32) -> (i32, i32) {
    %c0_i32 = arith.constant 0 : i32
    %c0_i32_0 = arith.constant 0 : i32
    return %arg0, %c0_i32 : i32, i32
  }
}

</mosaic_0001>

<llo_original>
// kernel: tpu_custom_call.1
$region0: #{tpu_custom_call.1}
  #allocation0 [shape = 'u32[]', space=smem, size = 0x4, offset = 0x4, fixed_abs, tag = 'smem constant byte address 0x4 - core index']
  #allocation1 [shape = 'u32[72,128]{1,0:T(1,128)}', space=vmem, size = 0x9000, scoped, tag = 'internal scratch']
  #allocation2 [shape = 'f32[1,1]{1,0:T(1,128)S(1)}', space=vmem, size = 0x200, scoped, tag = 'scoped memory for tpu_custom_call.1']
  %s0 = inlined_call_operand.vmem [shape: f32[40,32], index: 0, kind: input, shape index: {}]
  %s1 = inlined_call_operand.hbm [shape: f32[32,512], index: 1, kind: input, shape index: {}]
  %s2 = inlined_call_operand.vmem [shape: f32[1,512], index: 2, kind: input, shape index: {}]
  %s3 = inlined_call_operand.hbm [shape: f32[512,256], index: 3, kind: input, shape index: {}]
  %s4 = inlined_call_operand.vmem [shape: f32[1,256], index: 4, kind: input, shape index: {}]
  %s5 = inlined_call_operand.hbm [shape: f32[256,128], index: 5, kind: input, shape index: {}]
  %s6 = inlined_call_operand.vmem [shape: f32[1,128], index: 6, kind: input, shape index: {}]
  %s7 = inlined_call_operand.vmem [shape: f32[1,128], index: 7, kind: input, shape index: {}]
  %s8 = inlined_call_operand.<no memory space> [shape: f32[1,1], index: 8, kind: input, shape index: {}]
  %s9 = inlined_call_operand.vmem [shape: f32[40,1], index: 9, kind: output, shape index: {}]
  %s10 = sld [smem:[#allocation0]]
  $region58: #{tpu_custom_call.1} parent=0
    _
  %s12 = ssub.s32 1, %s10
  %s13 = scalar_select 0, %s12, %s10
  %v14 = vstv %s8
  %15 = vst [vmem:[#allocation2] sm:$0x1] %v14
  $region1: #{tpu_custom_call.1} parent=0
    #allocation3 [shape = 'u8[65536]{0}', space=vmem, size = 0x10000, scoped, tag = 'input window, operand 1, single buffered']
    #allocation4 [shape = 's32[1]{0}', space=sflag, size = 0x4, scoped, tag = 'scoped memory for tpu_custom_call.1']
    #allocation5 [shape = 'u8[524288]{0}', space=vmem, size = 0x80000, scoped, tag = 'input window, operand 3, single buffered']
    #allocation6 [shape = 's32[1]{0}', space=sflag, size = 0x4, scoped, tag = 'scoped memory for tpu_custom_call.1']
    #allocation7 [shape = 'u8[131072]{0}', space=vmem, size = 0x20000, scoped, tag = 'input window, operand 5, single buffered']
    %16 = vsyncpa [#allocation4], 0
    %17 = vsyncpa [#allocation6], 0
    // Predicated region
    $region2: #{tpu_custom_call.1} parent=1 // pred_check
      _
    $region3: #{tpu_custom_call.1} parent=1 // pred_check_branch
      %19 = sbr.rel (0) target = $region5
    $region4: #{tpu_custom_call.1} parent=1 // pred_region
      _
    $region5: #{tpu_custom_call.1} parent=1 // pred_fallthru
      _
    // Predicated region
    $region6: #{tpu_custom_call.1} parent=1 // pred_check
      _
    $region7: #{tpu_custom_call.1} parent=1 // pred_check_branch
      %21 = sbr.rel (0) target = $region9
    $region8: #{tpu_custom_call.1} parent=1 // pred_region
      %23 = vsyncadd [#allocation4], 0
      %s24 = sshll.u32 %s1, 4
      %s25 = int_to_ptr.hbm [resolvable:$true] %s24
      %s26 = sshll.u32 [#allocation3], 4
      %s27 = int_to_ptr.vmem [resolvable:$true] %s26
      %32 = dma.hbm_to_vmem [thread:$0]  %s25, 2048, %s27, [#allocation4], 512, 512, 32
    $region9: #{tpu_custom_call.1} parent=1 // pred_fallthru
      _
    // Predicated region
    $region10: #{tpu_custom_call.1} parent=1 // pred_check
      _
    $region11: #{tpu_custom_call.1} parent=1 // pred_check_branch
      %34 = sbr.rel (0) target = $region13
    $region12: #{tpu_custom_call.1} parent=1 // pred_region
      _
    $region13: #{tpu_custom_call.1} parent=1 // pred_fallthru
      _
    // Predicated region
    $region14: #{tpu_custom_call.1} parent=1 // pred_check
      _
    $region15: #{tpu_custom_call.1} parent=1 // pred_check_branch
      %36 = sbr.rel (0) target = $region17
    $region16: #{tpu_custom_call.1} parent=1 // pred_region
      %38 = vsyncadd [#allocation6], 0
      %s39 = sshll.u32 %s3, 4
      %s40 = int_to_ptr.hbm [resolvable:$true] %s39
      %s41 = sshll.u32 [#allocation5], 4
      %s42 = int_to_ptr.vmem [resolvable:$true] %s41
      %47 = dma.hbm_to_vmem [thread:$0]  %s40, 16384, %s42, [#allocation6], 256, 256, 16
    $region17: #{tpu_custom_call.1} parent=1 // pred_fallthru
      _
    // Predicated region
    $region18: #{tpu_custom_call.1} parent=1 // pred_check
      _
    $region19: #{tpu_custom_call.1} parent=1 // pred_check_branch
      %49 = sbr.rel (0) target = $region21
    $region20: #{tpu_custom_call.1} parent=1 // pred_region
      _
    $region21: #{tpu_custom_call.1} parent=1 // pred_fallthru
      _
    // Predicated region
    $region22: #{tpu_custom_call.1} parent=1 // pred_check
      _
    $region23: #{tpu_custom_call.1} parent=1 // pred_check_branch
      %51 = sbr.rel (0) target = $region25
    $region24: #{tpu_custom_call.1} parent=1 // pred_region
      %53 = vsyncadd [#allocation6], 0
      %s54 = sshll.u32 %s5, 4
      %s55 = int_to_ptr.hbm [resolvable:$true] %s54
      %s56 = sshll.u32 [#allocation7], 4
      %s57 = int_to_ptr.vmem [resolvable:$true] %s56
      %62 = dma.hbm_to_vmem [thread:$0]  %s55, 4096, %s57, [#allocation6], 128, 128, 8
    $region25: #{tpu_custom_call.1} parent=1 // pred_fallthru
      _
    // Predicated region
    $region26: #{tpu_custom_call.1} parent=1 // pred_check
      _
    $region27: #{tpu_custom_call.1} parent=1 // pred_check_branch
      %64 = sbr.rel (0) target = $region29
    $region28: #{tpu_custom_call.1} parent=1 // pred_region
      _
    $region29: #{tpu_custom_call.1} parent=1 // pred_fallthru
      _
    // Predicated region
    $region30: #{tpu_custom_call.1} parent=1 // pred_check
      _
    $region31: #{tpu_custom_call.1} parent=1 // pred_check_branch
      %66 = sbr.rel (0) target = $region33
    $region32: #{tpu_custom_call.1} parent=1 // pred_region
      _
    $region33: #{tpu_custom_call.1} parent=1 // pred_fallthru
      _
    // Predicated region
    $region34: #{tpu_custom_call.1} parent=1 // pred_check
      _
    $region35: #{tpu_custom_call.1} parent=1 // pred_check_branch
      %68 = sbr.rel (0) target = $region37
    $region36: #{tpu_custom_call.1} parent=1 // pred_region
      _
    $region37: #{tpu_custom_call.1} parent=1 // pred_fallthru
      _
    // Predicated region
    $region38: #{tpu_custom_call.1} parent=1 // pred_check
      _
    $region39: #{tpu_custom_call.1} parent=1 // pred_check_branch
      %70 = sbr.rel (0) target = $region41
    $region40: #{tpu_custom_call.1} parent=1 // pred_region
      %72 = dma.done [#allocation4], 2048
    $region41: #{tpu_custom_call.1} parent=1 // pred_fallthru
      _
    // Predicated region
    $region42: #{tpu_custom_call.1} parent=1 // pred_check
      _
    $region43: #{tpu_custom_call.1} parent=1 // pred_check_branch
      %74 = sbr.rel (0) target = $region45
    $region44: #{tpu_custom_call.1} parent=1 // pred_region
      %76 = dma.done [#allocation6], 16384
    $region45: #{tpu_custom_call.1} parent=1 // pred_fallthru
      _
    // Predicated region
    $region46: #{tpu_custom_call.1} parent=1 // pred_check
      _
    $region47: #{tpu_custom_call.1} parent=1 // pred_check_branch
      %78 = sbr.rel (0) target = $region49
    $region48: #{tpu_custom_call.1} parent=1 // pred_region
      %80 = dma.done [#allocation6], 4096
    $region49: #{tpu_custom_call.1} parent=1 // pred_fallthru
      _
    %v81 = vld [vmem:[%s0] sm:$0xff]
    %v82 = vld [vmem:[%s0 + $0x8] sm:$0xff]
    %v83 = vld [vmem:[%s0 + $0x10] sm:$0xff]
    %v84 = vld [vmem:[%s0 + $0x18] sm:$0xff]
    %v85 = vld [vmem:[%s0 + $0x20] sm:$0xff]
    %v86 = vld [vmem:[#allocation3] sm:$0xff]
    %v87 = vld [vmem:[#allocation3 + $0x8] sm:$0xff]
    %v88 = vld [vmem:[#allocation3 + $0x10] sm:$0xff]
    %v89 = vld [vmem:[#allocation3 + $0x18] sm:$0xff]
    %v90 = vld [vmem:[#allocation3 + $0x20] sm:$0xff]
    %v91 = vld [vmem:[#allocation3 + $0x28] sm:$0xff]
    %v92 = vld [vmem:[#allocation3 + $0x30] sm:$0xff]
    %v93 = vld [vmem:[#allocation3 + $0x38] sm:$0xff]
    %v94 = vld [vmem:[#allocation3 + $0x40] sm:$0xff]
    %v95 = vld [vmem:[#allocation3 + $0x48] sm:$0xff]
    %v96 = vld [vmem:[#allocation3 + $0x50] sm:$0xff]
    %v97 = vld [vmem:[#allocation3 + $0x58] sm:$0xff]
    %v98 = vld [vmem:[#allocation3 + $0x60] sm:$0xff]
    %v99 = vld [vmem:[#allocation3 + $0x68] sm:$0xff]
    %v100 = vld [vmem:[#allocation3 + $0x70] sm:$0xff]
    %v101 = vld [vmem:[#allocation3 + $0x78] sm:$0xff]
    %v102 = vld [vmem:[%s2] sm:$0xf]
    %v104 = vperm.slane %v102, 0
    %v105 = vperm.slane %v102, 1
    %v106 = vperm.slane %v102, 2
    %v107 = vperm.slane %v102, 3
    %vm112 = vcmask 261120
    %v114 = vsel %vm112, %v81, 0
    %v117 = vsel %vm112, %v82, 0
    %v120 = vsel %vm112, %v83, 0
    %v123 = vsel %vm112, %v84, 0
    %v126 = vsel %vm112, %v85, 0
    %128 = vmatpush.msra.mxu0 0.0
    %129 = vmatpush.msra.mxu0 0.0
    %130 = vmatpush.msra.mxu0 0.0
    %131 = vmatpush.msra.mxu0 0.0
    %132 = vmatpush.msra.mxu0 0.0
    %133 = vmatpush.msra.mxu0 0.0
    %134 = vmatpush.msra.mxu0 0.0
    %135 = vmatpush.msra.mxu0 0.0
    %136 = vmatpush.msra.mxu0 0.0
    %137 = vmatpush.msra.mxu0 0.0
    %138 = vmatpush.msra.mxu0 0.0
    %139 = vmatpush.msra.mxu0 0.0
    %140 = vmatpush.msra.mxu0 %v98
    %141 = vmatpush.msra.mxu0 %v94
    %142 = vmatpush.msra.mxu0 %v90
    %143 = vmatpush.msra.mxu0 %v86
    %144 = vmatmul.f32.gmra.mxu0 %v114
    %v145 = vpop.f32.mrf.mxu0
    %v146 = vadd.f32 %v104, %v145
    %147 = vmatmul.f32.gmra.mxu0 %v117
    %v148 = vpop.f32.mrf.mxu0
    %v149 = vadd.f32 %v104, %v148
    %150 = vmatmul.f32.gmra.mxu0 %v120
    %v151 = vpop.f32.mrf.mxu0
    %v152 = vadd.f32 %v104, %v151
    %153 = vmatmul.f32.gmra.mxu0 %v123
    %v154 = vpop.f32.mrf.mxu0
    %v155 = vadd.f32 %v104, %v154
    %156 = vmatmul.f32.gmra.mxu0 %v126
    %v157 = vpop.f32.mrf.mxu0
    %v158 = vadd.f32 %v104, %v157
    %159 = vdwg.mxu0
    %160 = vmatpush.msra.mxu0 0.0
    %161 = vmatpush.msra.mxu0 0.0
    %162 = vmatpush.msra.mxu0 0.0
    %163 = vmatpush.msra.mxu0 0.0
    %164 = vmatpush.msra.mxu0 0.0
    %165 = vmatpush.msra.mxu0 0.0
    %166 = vmatpush.msra.mxu0 0.0
    %167 = vmatpush.msra.mxu0 0.0
    %168 = vmatpush.msra.mxu0 0.0
    %169 = vmatpush.msra.mxu0 0.0
    %170 = vmatpush.msra.mxu0 0.0
    %171 = vmatpush.msra.mxu0 0.0
    %172 = vmatpush.msra.mxu0 %v99
    %173 = vmatpush.msra.mxu0 %v95
    %174 = vmatpush.msra.mxu0 %v91
    %175 = vmatpush.msra.mxu0 %v87
    %176 = vmatmul.f32.gmra.mxu0 %v114
    %v177 = vpop.f32.mrf.mxu0
    %v178 = vadd.f32 %v105, %v177
    %179 = vmatmul.f32.gmra.mxu0 %v117
    %v180 = vpop.f32.mrf.mxu0
    %v181 = vadd.f32 %v105, %v180
    %182 = vmatmul.f32.gmra.mxu0 %v120
    %v183 = vpop.f32.mrf.mxu0
    %v184 = vadd.f32 %v105, %v183
    %185 = vmatmul.f32.gmra.mxu0 %v123
    %v186 = vpop.f32.mrf.mxu0
    %v187 = vadd.f32 %v105, %v186
    %188 = vmatmul.f32.gmra.mxu0 %v126
    %v189 = vpop.f32.mrf.mxu0
    %v190 = vadd.f32 %v105, %v189
    %191 = vdwg.mxu0
    %192 = vmatpush.msra.mxu0 0.0
    %193 = vmatpush.msra.mxu0 0.0
    %194 = vmatpush.msra.mxu0 0.0
    %195 = vmatpush.msra.mxu0 0.0
    %196 = vmatpush.msra.mxu0 0.0
    %197 = vmatpush.msra.mxu0 0.0
    %198 = vmatpush.msra.mxu0 0.0
    %199 = vmatpush.msra.mxu0 0.0
    %200 = vmatpush.msra.mxu0 0.0
    %201 = vmatpush.msra.mxu0 0.0
    %202 = vmatpush.msra.mxu0 0.0
    %203 = vmatpush.msra.mxu0 0.0
    %204 = vmatpush.msra.mxu0 %v100
    %205 = vmatpush.msra.mxu0 %v96
    %206 = vmatpush.msra.mxu0 %v92
    %207 = vmatpush.msra.mxu0 %v88
    %208 = vmatmul.f32.gmra.mxu0 %v114
    %v209 = vpop.f32.mrf.mxu0
    %v210 = vadd.f32 %v106, %v209
    %211 = vmatmul.f32.gmra.mxu0 %v117
    %v212 = vpop.f32.mrf.mxu0
    %v213 = vadd.f32 %v106, %v212
    %214 = vmatmul.f32.gmra.mxu0 %v120
    %v215 = vpop.f32.mrf.mxu0
    %v216 = vadd.f32 %v106, %v215
    %217 = vmatmul.f32.gmra.mxu0 %v123
    %v218 = vpop.f32.mrf.mxu0
    %v219 = vadd.f32 %v106, %v218
    %220 = vmatmul.f32.gmra.mxu0 %v126
    %v221 = vpop.f32.mrf.mxu0
    %v222 = vadd.f32 %v106, %v221
    %223 = vdwg.mxu0
    %224 = vmatpush.msra.mxu0 0.0
    %225 = vmatpush.msra.mxu0 0.0
    %226 = vmatpush.msra.mxu0 0.0
    %227 = vmatpush.msra.mxu0 0.0
    %228 = vmatpush.msra.mxu0 0.0
    %229 = vmatpush.msra.mxu0 0.0
    %230 = vmatpush.msra.mxu0 0.0
    %231 = vmatpush.msra.mxu0 0.0
    %232 = vmatpush.msra.mxu0 0.0
    %233 = vmatpush.msra.mxu0 0.0
    %234 = vmatpush.msra.mxu0 0.0
    %235 = vmatpush.msra.mxu0 0.0
    %236 = vmatpush.msra.mxu0 %v101
    %237 = vmatpush.msra.mxu0 %v97
    %238 = vmatpush.msra.mxu0 %v93
    %239 = vmatpush.msra.mxu0 %v89
    %240 = vmatmul.f32.gmra.mxu0 %v114
    %v241 = vpop.f32.mrf.mxu0
    %v242 = vadd.f32 %v107, %v241
    %243 = vmatmul.f32.gmra.mxu0 %v117
    %v244 = vpop.f32.mrf.mxu0
    %v245 = vadd.f32 %v107, %v244
    %246 = vmatmul.f32.gmra.mxu0 %v120
    %v247 = vpop.f32.mrf.mxu0
    %v248 = vadd.f32 %v107, %v247
    %249 = vmatmul.f32.gmra.mxu0 %v123
    %v250 = vpop.f32.mrf.mxu0
    %v251 = vadd.f32 %v107, %v250
    %252 = vmatmul.f32.gmra.mxu0 %v126
    %v253 = vpop.f32.mrf.mxu0
    %v254 = vadd.f32 %v107, %v253
    %255 = vdwg.mxu0
    %vm256 = vcmp.gt.f32.partialorder %v146, 0.0
    %vm257 = vcmp.gt.f32.partialorder %v178, 0.0
    %vm258 = vcmp.gt.f32.partialorder %v210, 0.0
    %vm259 = vcmp.gt.f32.partialorder %v242, 0.0
    %vm260 = vcmp.gt.f32.partialorder %v149, 0.0
    %vm261 = vcmp.gt.f32.partialorder %v181, 0.0
    %vm262 = vcmp.gt.f32.partialorder %v213, 0.0
    %vm263 = vcmp.gt.f32.partialorder %v245, 0.0
    %vm264 = vcmp.gt.f32.partialorder %v152, 0.0
    %vm265 = vcmp.gt.f32.partialorder %v184, 0.0
    %vm266 = vcmp.gt.f32.partialorder %v216, 0.0
    %vm267 = vcmp.gt.f32.partialorder %v248, 0.0
    %vm268 = vcmp.gt.f32.partialorder %v155, 0.0
    %vm269 = vcmp.gt.f32.partialorder %v187, 0.0
    %vm270 = vcmp.gt.f32.partialorder %v219, 0.0
    %vm271 = vcmp.gt.f32.partialorder %v251, 0.0
    %vm272 = vcmp.gt.f32.partialorder %v158, 0.0
    %vm273 = vcmp.gt.f32.partialorder %v190, 0.0
    %vm274 = vcmp.gt.f32.partialorder %v222, 0.0
    %vm275 = vcmp.gt.f32.partialorder %v254, 0.0
    %v276 = vmul.f32 %v146, 1.442695
    %v277 = vpow.pop %v276
    %v278 = vmul.f32 %v178, 1.442695
    %v279 = vpow.pop %v278
    %v280 = vmul.f32 %v210, 1.442695
    %v281 = vpow.pop %v280
    %v282 = vmul.f32 %v242, 1.442695
    %v283 = vpow.pop %v282
    %v284 = vmul.f32 %v149, 1.442695
    %v285 = vpow.pop %v284
    %v286 = vmul.f32 %v181, 1.442695
    %v287 = vpow.pop %v286
    %v288 = vmul.f32 %v213, 1.442695
    %v289 = vpow.pop %v288
    %v290 = vmul.f32 %v245, 1.442695
    %v291 = vpow.pop %v290
    %v292 = vmul.f32 %v152, 1.442695
    %v293 = vpow.pop %v292
    %v294 = vmul.f32 %v184, 1.442695
    %v295 = vpow.pop %v294
    %v296 = vmul.f32 %v216, 1.442695
    %v297 = vpow.pop %v296
    %v298 = vmul.f32 %v248, 1.442695
    %v299 = vpow.pop %v298
    %v300 = vmul.f32 %v155, 1.442695
    %v301 = vpow.pop %v300
    %v302 = vmul.f32 %v187, 1.442695
    %v303 = vpow.pop %v302
    %v304 = vmul.f32 %v219, 1.442695
    %v305 = vpow.pop %v304
    %v306 = vmul.f32 %v251, 1.442695
    %v307 = vpow.pop %v306
    %v308 = vmul.f32 %v158, 1.442695
    %v309 = vpow.pop %v308
    %v310 = vmul.f32 %v190, 1.442695
    %v311 = vpow.pop %v310
    %v312 = vmul.f32 %v222, 1.442695
    %v313 = vpow.pop %v312
    %v314 = vmul.f32 %v254, 1.442695
    %v315 = vpow.pop %v314
    %v316 = vsub.f32 %v277, 1.0
    %v317 = vsub.f32 %v279, 1.0
    %v318 = vsub.f32 %v281, 1.0
    %v319 = vsub.f32 %v283, 1.0
    %v320 = vsub.f32 %v285, 1.0
    %v321 = vsub.f32 %v287, 1.0
    %v322 = vsub.f32 %v289, 1.0
    %v323 = vsub.f32 %v291, 1.0
    %v324 = vsub.f32 %v293, 1.0
    %v325 = vsub.f32 %v295, 1.0
    %v326 = vsub.f32 %v297, 1.0
    %v327 = vsub.f32 %v299, 1.0
    %v328 = vsub.f32 %v301, 1.0
    %v329 = vsub.f32 %v303, 1.0
    %v330 = vsub.f32 %v305, 1.0
    %v331 = vsub.f32 %v307, 1.0
    %v332 = vsub.f32 %v309, 1.0
    %v333 = vsub.f32 %v311, 1.0
    %v334 = vsub.f32 %v313, 1.0
    %v335 = vsub.f32 %v315, 1.0
    %v336 = vsel %vm256, %v146, %v316
    %v337 = vsel %vm257, %v178, %v317
    %v338 = vsel %vm258, %v210, %v318
    %v339 = vsel %vm259, %v242, %v319
    %v340 = vsel %vm260, %v149, %v320
    %v341 = vsel %vm261, %v181, %v321
    %v342 = vsel %vm262, %v213, %v322
    %v343 = vsel %vm263, %v245, %v323
    %v344 = vsel %vm264, %v152, %v324
    %v345 = vsel %vm265, %v184, %v325
    %v346 = vsel %vm266, %v216, %v326
    %v347 = vsel %vm267, %v248, %v327
    %v348 = vsel %vm268, %v155, %v328
    %v349 = vsel %vm269, %v187, %v329
    %v350 = vsel %vm270, %v219, %v330
    %v351 = vsel %vm271, %v251, %v331
    %v352 = vsel %vm272, %v158, %v332
    %v353 = vsel %vm273, %v190, %v333
    %v354 = vsel %vm274, %v222, %v334
    %v355 = vsel %vm275, %v254, %v335
    %v356 = vld [vmem:[#allocation5] sm:$0xff]
    %v357 = vld [vmem:[#allocation5 + $0x8] sm:$0xff]
    %v358 = vld [vmem:[#allocation5 + $0x10] sm:$0xff]
    %v359 = vld [vmem:[#allocation5 + $0x18] sm:$0xff]
    %v360 = vld [vmem:[#allocation5 + $0x20] sm:$0xff]
    %v361 = vld [vmem:[#allocation5 + $0x28] sm:$0xff]
    %v362 = vld [vmem:[#allocation5 + $0x30] sm:$0xff]
    %v363 = vld [vmem:[#allocation5 + $0x38] sm:$0xff]
    %v364 = vld [vmem:[#allocation5 + $0x40] sm:$0xff]
    %v365 = vld [vmem:[#allocation5 + $0x48] sm:$0xff]
    %v366 = vld [vmem:[#allocation5 + $0x50] sm:$0xff]
    %v367 = vld [vmem:[#allocation5 + $0x58] sm:$0xff]
    %v368 = vld [vmem:[#allocation5 + $0x60] sm:$0xff]
    %v369 = vld [vmem:[#allocation5 + $0x68] sm:$0xff]
    %v370 = vld [vmem:[#allocation5 + $0x70] sm:$0xff]
    %v371 = vld [vmem:[#allocation5 + $0x78] sm:$0xff]
    %v372 = vld [vmem:[#allocation5 + $0x80] sm:$0xff]
    %v373 = vld [vmem:[#allocation5 + $0x88] sm:$0xff]
    %v374 = vld [vmem:[#allocation5 + $0x90] sm:$0xff]
    %v375 = vld [vmem:[#allocation5 + $0x98] sm:$0xff]
    %v376 = vld [vmem:[#allocation5 + $0xa0] sm:$0xff]
    %v377 = vld [vmem:[#allocation5 + $0xa8] sm:$0xff]
    %v378 = vld [vmem:[#allocation5 + $0xb0] sm:$0xff]
    %v379 = vld [vmem:[#allocation5 + $0xb8] sm:$0xff]
    %v380 = vld [vmem:[#allocation5 + $0xc0] sm:$0xff]
    %v381 = vld [vmem:[#allocation5 + $0xc8] sm:$0xff]
    %v382 = vld [vmem:[#allocation5 + $0xd0] sm:$0xff]
    %v383 = vld [vmem:[#allocation5 + $0xd8] sm:$0xff]
    %v384 = vld [vmem:[#allocation5 + $0xe0] sm:$0xff]
    %v385 = vld [vmem:[#allocation5 + $0xe8] sm:$0xff]
    %v386 = vld [vmem:[#allocation5 + $0xf0] sm:$0xff]
    %v387 = vld [vmem:[#allocation5 + $0xf8] sm:$0xff]
    %v388 = vld [vmem:[#allocation5 + $0x100] sm:$0xff]
    %v389 = vld [vmem:[#allocation5 + $0x108] sm:$0xff]
    %v390 = vld [vmem:[#allocation5 + $0x110] sm:$0xff]
    %v391 = vld [vmem:[#allocation5 + $0x118] sm:$0xff]
    %v392 = vld [vmem:[#allocation5 + $0x120] sm:$0xff]
    %v393 = vld [vmem:[#allocation5 + $0x128] sm:$0xff]
    %v394 = vld [vmem:[#allocation5 + $0x130] sm:$0xff]
    %v395 = vld [vmem:[#allocation5 + $0x138] sm:$0xff]
    %v396 = vld [vmem:[#allocation5 + $0x140] sm:$0xff]
    %v397 = vld [vmem:[#allocation5 + $0x148] sm:$0xff]
    %v398 = vld [vmem:[#allocation5 + $0x150] sm:$0xff]
    %v399 = vld [vmem:[#allocation5 + $0x158] sm:$0xff]
    %v400 = vld [vmem:[#allocation5 + $0x160] sm:$0xff]
    %v401 = vld [vmem:[#allocation5 + $0x168] sm:$0xff]
    %v402 = vld [vmem:[#allocation5 + $0x170] sm:$0xff]
    %v403 = vld [vmem:[#allocation5 + $0x178] sm:$0xff]
    %v404 = vld [vmem:[#allocation5 + $0x180] sm:$0xff]
    %v405 = vld [vmem:[#allocation5 + $0x188] sm:$0xff]
    %v406 = vld [vmem:[#allocation5 + $0x190] sm:$0xff]
    %v407 = vld [vmem:[#allocation5 + $0x198] sm:$0xff]
    %v408 = vld [vmem:[#allocation5 + $0x1a0] sm:$0xff]
    %v409 = vld [vmem:[#allocation5 + $0x1a8] sm:$0xff]
    %v410 = vld [vmem:[#allocation5 + $0x1b0] sm:$0xff]
    %v411 = vld [vmem:[#allocation5 + $0x1b8] sm:$0xff]
    %v412 = vld [vmem:[#allocation5 + $0x1c0] sm:$0xff]
    %v413 = vld [vmem:[#allocation5 + $0x1c8] sm:$0xff]
    %v414 = vld [vmem:[#allocation5 + $0x1d0] sm:$0xff]
    %v415 = vld [vmem:[#allocation5 + $0x1d8] sm:$0xff]
    %v416 = vld [vmem:[#allocation5 + $0x1e0] sm:$0xff]
    %v417 = vld [vmem:[#allocation5 + $0x1e8] sm:$0xff]
    %v418 = vld [vmem:[#allocation5 + $0x1f0] sm:$0xff]
    %v419 = vld [vmem:[#allocation5 + $0x1f8] sm:$0xff]
    %v420 = vld [vmem:[#allocation5 + $0x200] sm:$0xff]
    %v421 = vld [vmem:[#allocation5 + $0x208] sm:$0xff]
    %v422 = vld [vmem:[#allocation5 + $0x210] sm:$0xff]
    %v423 = vld [vmem:[#allocation5 + $0x218] sm:$0xff]
    %v424 = vld [vmem:[#allocation5 + $0x220] sm:$0xff]
    %v425 = vld [vmem:[#allocation5 + $0x228] sm:$0xff]
    %v426 = vld [vmem:[#allocation5 + $0x230] sm:$0xff]
    %v427 = vld [vmem:[#allocation5 + $0x238] sm:$0xff]
    %v428 = vld [vmem:[#allocation5 + $0x240] sm:$0xff]
    %v429 = vld [vmem:[#allocation5 + $0x248] sm:$0xff]
    %v430 = vld [vmem:[#allocation5 + $0x250] sm:$0xff]
    %v431 = vld [vmem:[#allocation5 + $0x258] sm:$0xff]
    %v432 = vld [vmem:[#allocation5 + $0x260] sm:$0xff]
    %v433 = vld [vmem:[#allocation5 + $0x268] sm:$0xff]
    %v434 = vld [vmem:[#allocation5 + $0x270] sm:$0xff]
    %v435 = vld [vmem:[#allocation5 + $0x278] sm:$0xff]
    %v436 = vld [vmem:[#allocation5 + $0x280] sm:$0xff]
    %v437 = vld [vmem:[#allocation5 + $0x288] sm:$0xff]
    %v438 = vld [vmem:[#allocation5 + $0x290] sm:$0xff]
    %v439 = vld [vmem:[#allocation5 + $0x298] sm:$0xff]
    %v440 = vld [vmem:[#allocation5 + $0x2a0] sm:$0xff]
    %v441 = vld [vmem:[#allocation5 + $0x2a8] sm:$0xff]
    %v442 = vld [vmem:[#allocation5 + $0x2b0] sm:$0xff]
    %v443 = vld [vmem:[#allocation5 + $0x2b8] sm:$0xff]
    %v444 = vld [vmem:[#allocation5 + $0x2c0] sm:$0xff]
    %v445 = vld [vmem:[#allocation5 + $0x2c8] sm:$0xff]
    %v446 = vld [vmem:[#allocation5 + $0x2d0] sm:$0xff]
    %v447 = vld [vmem:[#allocation5 + $0x2d8] sm:$0xff]
    %v448 = vld [vmem:[#allocation5 + $0x2e0] sm:$0xff]
    %v449 = vld [vmem:[#allocation5 + $0x2e8] sm:$0xff]
    %v450 = vld [vmem:[#allocation5 + $0x2f0] sm:$0xff]
    %v451 = vld [vmem:[#allocation5 + $0x2f8] sm:$0xff]
    %v452 = vld [vmem:[#allocation5 + $0x300] sm:$0xff]
    %v453 = vld [vmem:[#allocation5 + $0x308] sm:$0xff]
    %v454 = vld [vmem:[#allocation5 + $0x310] sm:$0xff]
    %v455 = vld [vmem:[#allocation5 + $0x318] sm:$0xff]
    %v456 = vld [vmem:[#allocation5 + $0x320] sm:$0xff]
    %v457 = vld [vmem:[#allocation5 + $0x328] sm:$0xff]
    %v458 = vld [vmem:[#allocation5 + $0x330] sm:$0xff]
    %v459 = vld [vmem:[#allocation5 + $0x338] sm:$0xff]
    %v460 = vld [vmem:[#allocation5 + $0x340] sm:$0xff]
    %v461 = vld [vmem:[#allocation5 + $0x348] sm:$0xff]
    %v462 = vld [vmem:[#allocation5 + $0x350] sm:$0xff]
    %v463 = vld [vmem:[#allocation5 + $0x358] sm:$0xff]
    %v464 = vld [vmem:[#allocation5 + $0x360] sm:$0xff]
    %v465 = vld [vmem:[#allocation5 + $0x368] sm:$0xff]
    %v466 = vld [vmem:[#allocation5 + $0x370] sm:$0xff]
    %v467 = vld [vmem:[#allocation5 + $0x378] sm:$0xff]
    %v468 = vld [vmem:[#allocation5 + $0x380] sm:$0xff]
    %v469 = vld [vmem:[#allocation5 + $0x388] sm:$0xff]
    %v470 = vld [vmem:[#allocation5 + $0x390] sm:$0xff]
    %v471 = vld [vmem:[#allocation5 + $0x398] sm:$0xff]
    %v472 = vld [vmem:[#allocation5 + $0x3a0] sm:$0xff]
    %v473 = vld [vmem:[#allocation5 + $0x3a8] sm:$0xff]
    %v474 = vld [vmem:[#allocation5 + $0x3b0] sm:$0xff]
    %v475 = vld [vmem:[#allocation5 + $0x3b8] sm:$0xff]
    %v476 = vld [vmem:[#allocation5 + $0x3c0] sm:$0xff]
    %v477 = vld [vmem:[#allocation5 + $0x3c8] sm:$0xff]
    %v478 = vld [vmem:[#allocation5 + $0x3d0] sm:$0xff]
    %v479 = vld [vmem:[#allocation5 + $0x3d8] sm:$0xff]
    %v480 = vld [vmem:[#allocation5 + $0x3e0] sm:$0xff]
    %v481 = vld [vmem:[#allocation5 + $0x3e8] sm:$0xff]
    %v482 = vld [vmem:[#allocation5 + $0x3f0] sm:$0xff]
    %v483 = vld [vmem:[#allocation5 + $0x3f8] sm:$0xff]
    %v484 = vld [vmem:[%s4] sm:$0x3]
    %v486 = vperm.slane %v484, 0
    %v487 = vperm.slane %v484, 1
    %490 = vmatpush.msra.mxu0 %v386
    %491 = vmatpush.msra.mxu0 %v384
    %492 = vmatpush.msra.mxu0 %v382
    %493 = vmatpush.msra.mxu0 %v380
    %494 = vmatpush.msra.mxu0 %v378
    %495 = vmatpush.msra.mxu0 %v376
    %496 = vmatpush.msra.mxu0 %v374
    %497 = vmatpush.msra.mxu0 %v372
    %498 = vmatpush.msra.mxu0 %v370
    %499 = vmatpush.msra.mxu0 %v368
    %500 = vmatpush.msra.mxu0 %v366
    %501 = vmatpush.msra.mxu0 %v364
    %502 = vmatpush.msra.mxu0 %v362
    %503 = vmatpush.msra.mxu0 %v360
    %504 = vmatpush.msra.mxu0 %v358
    %505 = vmatpush.msra.mxu0 %v356
    %506 = vmatmul.f32.gmra.mxu0 %v336
    %v507 = vpop.f32.mrf.mxu0
    %v508 = vadd.f32 %v486, %v507
    %509 = vmatmul.f32.gmra.mxu0 %v340
    %v510 = vpop.f32.mrf.mxu0
    %v511 = vadd.f32 %v486, %v510
    %512 = vmatmul.f32.gmra.mxu0 %v344
    %v513 = vpop.f32.mrf.mxu0
    %v514 = vadd.f32 %v486, %v513
    %515 = vmatmul.f32.gmra.mxu0 %v348
    %v516 = vpop.f32.mrf.mxu0
    %v517 = vadd.f32 %v486, %v516
    %518 = vmatmul.f32.gmra.mxu0 %v352
    %v519 = vpop.f32.mrf.mxu0
    %v520 = vadd.f32 %v486, %v519
    %521 = vdwg.mxu0
    %522 = vmatpush.msra.mxu0 %v418
    %523 = vmatpush.msra.mxu0 %v416
    %524 = vmatpush.msra.mxu0 %v414
    %525 = vmatpush.msra.mxu0 %v412
    %526 = vmatpush.msra.mxu0 %v410
    %527 = vmatpush.msra.mxu0 %v408
    %528 = vmatpush.msra.mxu0 %v406
    %529 = vmatpush.msra.mxu0 %v404
    %530 = vmatpush.msra.mxu0 %v402
    %531 = vmatpush.msra.mxu0 %v400
    %532 = vmatpush.msra.mxu0 %v398
    %533 = vmatpush.msra.mxu0 %v396
    %534 = vmatpush.msra.mxu0 %v394
    %535 = vmatpush.msra.mxu0 %v392
    %536 = vmatpush.msra.mxu0 %v390
    %537 = vmatpush.msra.mxu0 %v388
    %538 = vmatmul.f32.gmra.mxu0 %v337
    %v539 = vpop.f32.mrf.mxu0
    %v540 = vadd.f32 %v508, %v539
    %541 = vmatmul.f32.gmra.mxu0 %v341
    %v542 = vpop.f32.mrf.mxu0
    %v543 = vadd.f32 %v511, %v542
    %544 = vmatmul.f32.gmra.mxu0 %v345
    %v545 = vpop.f32.mrf.mxu0
    %v546 = vadd.f32 %v514, %v545
    %547 = vmatmul.f32.gmra.mxu0 %v349
    %v548 = vpop.f32.mrf.mxu0
    %v549 = vadd.f32 %v517, %v548
    %550 = vmatmul.f32.gmra.mxu0 %v353
    %v551 = vpop.f32.mrf.mxu0
    %v552 = vadd.f32 %v520, %v551
    %553 = vdwg.mxu0
    %554 = vmatpush.msra.mxu0 %v450
    %555 = vmatpush.msra.mxu0 %v448
    %556 = vmatpush.msra.mxu0 %v446
    %557 = vmatpush.msra.mxu0 %v444
    %558 = vmatpush.msra.mxu0 %v442
    %559 = vmatpush.msra.mxu0 %v440
    %560 = vmatpush.msra.mxu0 %v438
    %561 = vmatpush.msra.mxu0 %v436
    %562 = vmatpush.msra.mxu0 %v434
    %563 = vmatpush.msra.mxu0 %v432
    %564 = vmatpush.msra.mxu0 %v430
    %565 = vmatpush.msra.mxu0 %v428
    %566 = vmatpush.msra.mxu0 %v426
    %567 = vmatpush.msra.mxu0 %v424
    %568 = vmatpush.msra.mxu0 %v422
    %569 = vmatpush.msra.mxu0 %v420
    %570 = vmatmul.f32.gmra.mxu0 %v338
    %v571 = vpop.f32.mrf.mxu0
    %v572 = vadd.f32 %v540, %v571
    %573 = vmatmul.f32.gmra.mxu0 %v342
    %v574 = vpop.f32.mrf.mxu0
    %v575 = vadd.f32 %v543, %v574
    %576 = vmatmul.f32.gmra.mxu0 %v346
    %v577 = vpop.f32.mrf.mxu0
    %v578 = vadd.f32 %v546, %v577
    %579 = vmatmul.f32.gmra.mxu0 %v350
    %v580 = vpop.f32.mrf.mxu0
    %v581 = vadd.f32 %v549, %v580
    %582 = vmatmul.f32.gmra.mxu0 %v354
    %v583 = vpop.f32.mrf.mxu0
    %v584 = vadd.f32 %v552, %v583
    %585 = vdwg.mxu0
    %586 = vmatpush.msra.mxu0 %v482
    %587 = vmatpush.msra.mxu0 %v480
    %588 = vmatpush.msra.mxu0 %v478
    %589 = vmatpush.msra.mxu0 %v476
    %590 = vmatpush.msra.mxu0 %v474
    %591 = vmatpush.msra.mxu0 %v472
    %592 = vmatpush.msra.mxu0 %v470
    %593 = vmatpush.msra.mxu0 %v468
    %594 = vmatpush.msra.mxu0 %v466
    %595 = vmatpush.msra.mxu0 %v464
    %596 = vmatpush.msra.mxu0 %v462
    %597 = vmatpush.msra.mxu0 %v460
    %598 = vmatpush.msra.mxu0 %v458
    %599 = vmatpush.msra.mxu0 %v456
    %600 = vmatpush.msra.mxu0 %v454
    %601 = vmatpush.msra.mxu0 %v452
    %602 = vmatmul.f32.gmra.mxu0 %v339
    %v603 = vpop.f32.mrf.mxu0
    %v604 = vadd.f32 %v572, %v603
    %605 = vmatmul.f32.gmra.mxu0 %v343
    %v606 = vpop.f32.mrf.mxu0
    %v607 = vadd.f32 %v575, %v606
    %608 = vmatmul.f32.gmra.mxu0 %v347
    %v609 = vpop.f32.mrf.mxu0
    %v610 = vadd.f32 %v578, %v609
    %611 = vmatmul.f32.gmra.mxu0 %v351
    %v612 = vpop.f32.mrf.mxu0
    %v613 = vadd.f32 %v581, %v612
    %614 = vmatmul.f32.gmra.mxu0 %v355
    %v615 = vpop.f32.mrf.mxu0
    %v616 = vadd.f32 %v584, %v615
    %617 = vdwg.mxu0
    %618 = vmatpush.msra.mxu0 %v387
    %619 = vmatpush.msra.mxu0 %v385
    %620 = vmatpush.msra.mxu0 %v383
    %621 = vmatpush.msra.mxu0 %v381
    %622 = vmatpush.msra.mxu0 %v379
    %623 = vmatpush.msra.mxu0 %v377
    %624 = vmatpush.msra.mxu0 %v375
    %625 = vmatpush.msra.mxu0 %v373
    %626 = vmatpush.msra.mxu0 %v371
    %627 = vmatpush.msra.mxu0 %v369
    %628 = vmatpush.msra.mxu0 %v367
    %629 = vmatpush.msra.mxu0 %v365
    %630 = vmatpush.msra.mxu0 %v363
    %631 = vmatpush.msra.mxu0 %v361
    %632 = vmatpush.msra.mxu0 %v359
    %633 = vmatpush.msra.mxu0 %v357
    %634 = vmatmul.f32.gmra.mxu0 %v336
    %v635 = vpop.f32.mrf.mxu0
    %v636 = vadd.f32 %v487, %v635
    %637 = vmatmul.f32.gmra.mxu0 %v340
    %v638 = vpop.f32.mrf.mxu0
    %v639 = vadd.f32 %v487, %v638
    %640 = vmatmul.f32.gmra.mxu0 %v344
    %v641 = vpop.f32.mrf.mxu0
    %v642 = vadd.f32 %v487, %v641
    %643 = vmatmul.f32.gmra.mxu0 %v348
    %v644 = vpop.f32.mrf.mxu0
    %v645 = vadd.f32 %v487, %v644
    %646 = vmatmul.f32.gmra.mxu0 %v352
    %v647 = vpop.f32.mrf.mxu0
    %v648 = vadd.f32 %v487, %v647
    %649 = vdwg.mxu0
    %650 = vmatpush.msra.mxu0 %v419
    %651 = vmatpush.msra.mxu0 %v417
    %652 = vmatpush.msra.mxu0 %v415
    %653 = vmatpush.msra.mxu0 %v413
    %654 = vmatpush.msra.mxu0 %v411
    %655 = vmatpush.msra.mxu0 %v409
    %656 = vmatpush.msra.mxu0 %v407
    %657 = vmatpush.msra.mxu0 %v405
    %658 = vmatpush.msra.mxu0 %v403
    %659 = vmatpush.msra.mxu0 %v401
    %660 = vmatpush.msra.mxu0 %v399
    %661 = vmatpush.msra.mxu0 %v397
    %662 = vmatpush.msra.mxu0 %v395
    %663 = vmatpush.msra.mxu0 %v393
    %664 = vmatpush.msra.mxu0 %v391
    %665 = vmatpush.msra.mxu0 %v389
    %666 = vmatmul.f32.gmra.mxu0 %v337
    %v667 = vpop.f32.mrf.mxu0
    %v668 = vadd.f32 %v636, %v667
    %669 = vmatmul.f32.gmra.mxu0 %v341
    %v670 = vpop.f32.mrf.mxu0
    %v671 = vadd.f32 %v639, %v670
    %672 = vmatmul.f32.gmra.mxu0 %v345
    %v673 = vpop.f32.mrf.mxu0
    %v674 = vadd.f32 %v642, %v673
    %675 = vmatmul.f32.gmra.mxu0 %v349
    %v676 = vpop.f32.mrf.mxu0
    %v677 = vadd.f32 %v645, %v676
    %678 = vmatmul.f32.gmra.mxu0 %v353
    %v679 = vpop.f32.mrf.mxu0
    %v680 = vadd.f32 %v648, %v679
    %681 = vdwg.mxu0
    %682 = vmatpush.msra.mxu0 %v451
    %683 = vmatpush.msra.mxu0 %v449
    %684 = vmatpush.msra.mxu0 %v447
    %685 = vmatpush.msra.mxu0 %v445
    %686 = vmatpush.msra.mxu0 %v443
    %687 = vmatpush.msra.mxu0 %v441
    %688 = vmatpush.msra.mxu0 %v439
    %689 = vmatpush.msra.mxu0 %v437
    %690 = vmatpush.msra.mxu0 %v435
    %691 = vmatpush.msra.mxu0 %v433
    %692 = vmatpush.msra.mxu0 %v431
    %693 = vmatpush.msra.mxu0 %v429
    %694 = vmatpush.msra.mxu0 %v427
    %695 = vmatpush.msra.mxu0 %v425
    %696 = vmatpush.msra.mxu0 %v423
    %697 = vmatpush.msra.mxu0 %v421
    %698 = vmatmul.f32.gmra.mxu0 %v338
    %v699 = vpop.f32.mrf.mxu0
    %v700 = vadd.f32 %v668, %v699
    %701 = vmatmul.f32.gmra.mxu0 %v342
    %v702 = vpop.f32.mrf.mxu0
    %v703 = vadd.f32 %v671, %v702
    %704 = vmatmul.f32.gmra.mxu0 %v346
    %v705 = vpop.f32.mrf.mxu0
    %v706 = vadd.f32 %v674, %v705
    %707 = vmatmul.f32.gmra.mxu0 %v350
    %v708 = vpop.f32.mrf.mxu0
    %v709 = vadd.f32 %v677, %v708
    %710 = vmatmul.f32.gmra.mxu0 %v354
    %v711 = vpop.f32.mrf.mxu0
    %v712 = vadd.f32 %v680, %v711
    %713 = vdwg.mxu0
    %714 = vmatpush.msra.mxu0 %v483
    %715 = vmatpush.msra.mxu0 %v481
    %716 = vmatpush.msra.mxu0 %v479
    %717 = vmatpush.msra.mxu0 %v477
    %718 = vmatpush.msra.mxu0 %v475
    %719 = vmatpush.msra.mxu0 %v473
    %720 = vmatpush.msra.mxu0 %v471
    %721 = vmatpush.msra.mxu0 %v469
    %722 = vmatpush.msra.mxu0 %v467
    %723 = vmatpush.msra.mxu0 %v465
    %724 = vmatpush.msra.mxu0 %v463
    %725 = vmatpush.msra.mxu0 %v461
    %726 = vmatpush.msra.mxu0 %v459
    %727 = vmatpush.msra.mxu0 %v457
    %728 = vmatpush.msra.mxu0 %v455
    %729 = vmatpush.msra.mxu0 %v453
    %730 = vmatmul.f32.gmra.mxu0 %v339
    %v731 = vpop.f32.mrf.mxu0
    %v732 = vadd.f32 %v700, %v731
    %733 = vmatmul.f32.gmra.mxu0 %v343
    %v734 = vpop.f32.mrf.mxu0
    %v735 = vadd.f32 %v703, %v734
    %736 = vmatmul.f32.gmra.mxu0 %v347
    %v737 = vpop.f32.mrf.mxu0
    %v738 = vadd.f32 %v706, %v737
    %739 = vmatmul.f32.gmra.mxu0 %v351
    %v740 = vpop.f32.mrf.mxu0
    %v741 = vadd.f32 %v709, %v740
    %742 = vmatmul.f32.gmra.mxu0 %v355
    %v743 = vpop.f32.mrf.mxu0
    %v744 = vadd.f32 %v712, %v743
    %745 = vdwg.mxu0
    %vm746 = vcmp.gt.f32.partialorder %v604, 0.0
    %vm747 = vcmp.gt.f32.partialorder %v732, 0.0
    %vm748 = vcmp.gt.f32.partialorder %v607, 0.0
    %vm749 = vcmp.gt.f32.partialorder %v735, 0.0
    %vm750 = vcmp.gt.f32.partialorder %v610, 0.0
    %vm751 = vcmp.gt.f32.partialorder %v738, 0.0
    %vm752 = vcmp.gt.f32.partialorder %v613, 0.0
    %vm753 = vcmp.gt.f32.partialorder %v741, 0.0
    %vm754 = vcmp.gt.f32.partialorder %v616, 0.0
    %vm755 = vcmp.gt.f32.partialorder %v744, 0.0
    %v756 = vmul.f32 %v604, 1.442695
    %v757 = vpow.pop %v756
    %v758 = vmul.f32 %v732, 1.442695
    %v759 = vpow.pop %v758
    %v760 = vmul.f32 %v607, 1.442695
    %v761 = vpow.pop %v760
    %v762 = vmul.f32 %v735, 1.442695
    %v763 = vpow.pop %v762
    %v764 = vmul.f32 %v610, 1.442695
    %v765 = vpow.pop %v764
    %v766 = vmul.f32 %v738, 1.442695
    %v767 = vpow.pop %v766
    %v768 = vmul.f32 %v613, 1.442695
    %v769 = vpow.pop %v768
    %v770 = vmul.f32 %v741, 1.442695
    %v771 = vpow.pop %v770
    %v772 = vmul.f32 %v616, 1.442695
    %v773 = vpow.pop %v772
    %v774 = vmul.f32 %v744, 1.442695
    %v775 = vpow.pop %v774
    %v776 = vsub.f32 %v757, 1.0
    %v777 = vsub.f32 %v759, 1.0
    %v778 = vsub.f32 %v761, 1.0
    %v779 = vsub.f32 %v763, 1.0
    %v780 = vsub.f32 %v765, 1.0
    %v781 = vsub.f32 %v767, 1.0
    %v782 = vsub.f32 %v769, 1.0
    %v783 = vsub.f32 %v771, 1.0
    %v784 = vsub.f32 %v773, 1.0
    %v785 = vsub.f32 %v775, 1.0
    %v786 = vsel %vm746, %v604, %v776
    %v787 = vsel %vm747, %v732, %v777
    %v788 = vsel %vm748, %v607, %v778
    %v789 = vsel %vm749, %v735, %v779
    %v790 = vsel %vm750, %v610, %v780
    %v791 = vsel %vm751, %v738, %v781
    %v792 = vsel %vm752, %v613, %v782
    %v793 = vsel %vm753, %v741, %v783
    %v794 = vsel %vm754, %v616, %v784
    %v795 = vsel %vm755, %v744, %v785
    %v796 = vld [vmem:[#allocation7] sm:$0xff]
    %v797 = vld [vmem:[#allocation7 + $0x8] sm:$0xff]
    %v798 = vld [vmem:[#allocation7 + $0x10] sm:$0xff]
    %v799 = vld [vmem:[#allocation7 + $0x18] sm:$0xff]
    %v800 = vld [vmem:[#allocation7 + $0x20] sm:$0xff]
    %v801 = vld [vmem:[#allocation7 + $0x28] sm:$0xff]
    %v802 = vld [vmem:[#allocation7 + $0x30] sm:$0xff]
    %v803 = vld [vmem:[#allocation7 + $0x38] sm:$0xff]
    %v804 = vld [vmem:[#allocation7 + $0x40] sm:$0xff]
    %v805 = vld [vmem:[#allocation7 + $0x48] sm:$0xff]
    %v806 = vld [vmem:[#allocation7 + $0x50] sm:$0xff]
    %v807 = vld [vmem:[#allocation7 + $0x58] sm:$0xff]
    %v808 = vld [vmem:[#allocation7 + $0x60] sm:$0xff]
    %v809 = vld [vmem:[#allocation7 + $0x68] sm:$0xff]
    %v810 = vld [vmem:[#allocation7 + $0x70] sm:$0xff]
    %v811 = vld [vmem:[#allocation7 + $0x78] sm:$0xff]
    %v812 = vld [vmem:[#allocation7 + $0x80] sm:$0xff]
    %v813 = vld [vmem:[#allocation7 + $0x88] sm:$0xff]
    %v814 = vld [vmem:[#allocation7 + $0x90] sm:$0xff]
    %v815 = vld [vmem:[#allocation7 + $0x98] sm:$0xff]
    %v816 = vld [vmem:[#allocation7 + $0xa0] sm:$0xff]
    %v817 = vld [vmem:[#allocation7 + $0xa8] sm:$0xff]
    %v818 = vld [vmem:[#allocation7 + $0xb0] sm:$0xff]
    %v819 = vld [vmem:[#allocation7 + $0xb8] sm:$0xff]
    %v820 = vld [vmem:[#allocation7 + $0xc0] sm:$0xff]
    %v821 = vld [vmem:[#allocation7 + $0xc8] sm:$0xff]
    %v822 = vld [vmem:[#allocation7 + $0xd0] sm:$0xff]
    %v823 = vld [vmem:[#allocation7 + $0xd8] sm:$0xff]
    %v824 = vld [vmem:[#allocation7 + $0xe0] sm:$0xff]
    %v825 = vld [vmem:[#allocation7 + $0xe8] sm:$0xff]
    %v826 = vld [vmem:[#allocation7 + $0xf0] sm:$0xff]
    %v827 = vld [vmem:[#allocation7 + $0xf8] sm:$0xff]
    %v828 = vld [vmem:[%s6] sm:$0x1]
    %v830 = vperm.slane %v828, 0
    %832 = vmatpush.msra.mxu0 %v811
    %833 = vmatpush.msra.mxu0 %v810
    %834 = vmatpush.msra.mxu0 %v809
    %835 = vmatpush.msra.mxu0 %v808
    %836 = vmatpush.msra.mxu0 %v807
    %837 = vmatpush.msra.mxu0 %v806
    %838 = vmatpush.msra.mxu0 %v805
    %839 = vmatpush.msra.mxu0 %v804
    %840 = vmatpush.msra.mxu0 %v803
    %841 = vmatpush.msra.mxu0 %v802
    %842 = vmatpush.msra.mxu0 %v801
    %843 = vmatpush.msra.mxu0 %v800
    %844 = vmatpush.msra.mxu0 %v799
    %845 = vmatpush.msra.mxu0 %v798
    %846 = vmatpush.msra.mxu0 %v797
    %847 = vmatpush.msra.mxu0 %v796
    %848 = vmatmul.f32.gmra.mxu0 %v786
    %v849 = vpop.f32.mrf.mxu0
    %v850 = vadd.f32 %v830, %v849
    %851 = vmatmul.f32.gmra.mxu0 %v788
    %v852 = vpop.f32.mrf.mxu0
    %v853 = vadd.f32 %v830, %v852
    %854 = vmatmul.f32.gmra.mxu0 %v790
    %v855 = vpop.f32.mrf.mxu0
    %v856 = vadd.f32 %v830, %v855
    %857 = vmatmul.f32.gmra.mxu0 %v792
    %v858 = vpop.f32.mrf.mxu0
    %v859 = vadd.f32 %v830, %v858
    %860 = vmatmul.f32.gmra.mxu0 %v794
    %v861 = vpop.f32.mrf.mxu0
    %v862 = vadd.f32 %v830, %v861
    %863 = vdwg.mxu0
    %864 = vmatpush.msra.mxu0 %v827
    %865 = vmatpush.msra.mxu0 %v826
    %866 = vmatpush.msra.mxu0 %v825
    %867 = vmatpush.msra.mxu0 %v824
    %868 = vmatpush.msra.mxu0 %v823
    %869 = vmatpush.msra.mxu0 %v822
    %870 = vmatpush.msra.mxu0 %v821
    %871 = vmatpush.msra.mxu0 %v820
    %872 = vmatpush.msra.mxu0 %v819
    %873 = vmatpush.msra.mxu0 %v818
    %874 = vmatpush.msra.mxu0 %v817
    %875 = vmatpush.msra.mxu0 %v816
    %876 = vmatpush.msra.mxu0 %v815
    %877 = vmatpush.msra.mxu0 %v814
    %878 = vmatpush.msra.mxu0 %v813
    %879 = vmatpush.msra.mxu0 %v812
    %880 = vmatmul.f32.gmra.mxu0 %v787
    %v881 = vpop.f32.mrf.mxu0
    %v882 = vadd.f32 %v850, %v881
    %883 = vmatmul.f32.gmra.mxu0 %v789
    %v884 = vpop.f32.mrf.mxu0
    %v885 = vadd.f32 %v853, %v884
    %886 = vmatmul.f32.gmra.mxu0 %v791
    %v887 = vpop.f32.mrf.mxu0
    %v888 = vadd.f32 %v856, %v887
    %889 = vmatmul.f32.gmra.mxu0 %v793
    %v890 = vpop.f32.mrf.mxu0
    %v891 = vadd.f32 %v859, %v890
    %892 = vmatmul.f32.gmra.mxu0 %v795
    %v893 = vpop.f32.mrf.mxu0
    %v894 = vadd.f32 %v862, %v893
    %895 = vdwg.mxu0
    %vm896 = vcmp.gt.f32.partialorder %v882, 0.0
    %vm897 = vcmp.gt.f32.partialorder %v885, 0.0
    %vm898 = vcmp.gt.f32.partialorder %v888, 0.0
    %vm899 = vcmp.gt.f32.partialorder %v891, 0.0
    %vm900 = vcmp.gt.f32.partialorder %v894, 0.0
    %v901 = vmul.f32 %v882, 1.442695
    %v902 = vpow.pop %v901
    %v903 = vmul.f32 %v885, 1.442695
    %v904 = vpow.pop %v903
    %v905 = vmul.f32 %v888, 1.442695
    %v906 = vpow.pop %v905
    %v907 = vmul.f32 %v891, 1.442695
    %v908 = vpow.pop %v907
    %v909 = vmul.f32 %v894, 1.442695
    %v910 = vpow.pop %v909
    %v911 = vsub.f32 %v902, 1.0
    %v912 = vsub.f32 %v904, 1.0
    %v913 = vsub.f32 %v906, 1.0
    %v914 = vsub.f32 %v908, 1.0
    %v915 = vsub.f32 %v910, 1.0
    %v916 = vsel %vm896, %v882, %v911
    %v917 = vsel %vm897, %v885, %v912
    %v918 = vsel %vm898, %v888, %v913
    %v919 = vsel %vm899, %v891, %v914
    %v920 = vsel %vm900, %v894, %v915
    %v921 = vld [vmem:[%s7] sm:$0x1]
    %v923 = vperm.slane %v921, 0
    %v925 = vmul.f32 %v916, %v923
    %v926 = vmul.f32 %v917, %v923
    %v927 = vmul.f32 %v918, %v923
    %v928 = vmul.f32 %v919, %v923
    %v929 = vmul.f32 %v920, %v923
    %930 = vadd.xlane.f32.xlu0 %v925
    %v931 = vpop.xlane.xlu0 %930
    %932 = vadd.xlane.f32.xlu0 %v926
    %v933 = vpop.xlane.xlu0 %932
    %934 = vadd.xlane.f32.xlu0 %v927
    %v935 = vpop.xlane.xlu0 %934
    %936 = vadd.xlane.f32.xlu0 %v928
    %v937 = vpop.xlane.xlu0 %936
    %938 = vadd.xlane.f32.xlu0 %v929
    %v939 = vpop.xlane.xlu0 %938
    %v940 = vld [vmem:[#allocation2] sm:$0x1]
    %v942 = vperm.slane %v940, 0
    %v944 = vadd.f32 %v931, %v942
    %v945 = vadd.f32 %v933, %v942
    %v946 = vadd.f32 %v935, %v942
    %v947 = vadd.f32 %v937, %v942
    %v948 = vadd.f32 %v939, %v942
    %vm949 = vcmask 7168
    %950 = vst.msk [vmem:[%s9] sm:$0xff] %vm949, %v944
    %951 = vst.msk [vmem:[%s9 + $0x8] sm:$0xff] %vm949, %v945
    %952 = vst.msk [vmem:[%s9 + $0x10] sm:$0xff] %vm949, %v946
    %953 = vst.msk [vmem:[%s9 + $0x18] sm:$0xff] %vm949, %v947
    %954 = vst.msk [vmem:[%s9 + $0x20] sm:$0xff] %vm949, %v948
    // Predicated region
    $region50: #{tpu_custom_call.1} parent=1 // pred_check
      _
    $region51: #{tpu_custom_call.1} parent=1 // pred_check_branch
      %956 = sbr.rel (0) target = $region53
    $region52: #{tpu_custom_call.1} parent=1 // pred_region
      _
    $region53: #{tpu_custom_call.1} parent=1 // pred_fallthru
      _
    // Predicated region
    $region54: #{tpu_custom_call.1} parent=1 // pred_check
      _
    $region55: #{tpu_custom_call.1} parent=1 // pred_check_branch
      %958 = sbr.rel (0) target = $region57
    $region56: #{tpu_custom_call.1} parent=1 // pred_region
      _
    $region57: #{tpu_custom_call.1} parent=1 // pred_fallthru
      _
    %959 = vsyncpa [#allocation4], 1
    %960 = vsyncpa [#allocation6], 1

</llo_original>
